<compile_context>
chip_gen: v5e
topology: v5e:2x2
jax: 0.10.0
libtpu: 0.0.40
codegen_flags: <defaults>
</compile_context>

<pallas_src>
import functools

import jax
import jax.numpy as jnp
from jax.experimental import pallas as pl
from jax.experimental.pallas import tpu as pltpu


_VMEM_LIMIT_BYTES = 48 * 1024 * 1024      # safe on v5e/v6e (128 MiB) and v7x (64 MiB)
_TILE_VMEM_BUDGET = 20 * 1024 * 1024      # working-set budget used to size the tile


def _round_up(x, m):
    return ((x + m - 1) // m) * m


def _choose_point_tile(n, f32_rows_per_point):
    """Lane-width tile along the points axis.

    Multiple of 128 (>=256 preferred for the 256-wide v6e/v7x MXU), capped by a
    conservative VMEM budget (f32 intermediates + max accumulator scale ~linearly
    with the tile width), choosing the candidate that minimizes points padding.
    """
    if n <= 128:
        return 128
    cap = _TILE_VMEM_BUDGET // (4 * max(1, f32_rows_per_point))
    cap = max(256, min(2048, (cap // 256) * 256))
    best_t, best_pad = 256, _round_up(n, 256) - n
    t = 256
    while t <= cap:
        pad = _round_up(n, t) - n
        if pad <= best_pad:          # prefer larger tiles on ties
            best_t, best_pad = t, pad
        t += 256
    return best_t


def _fold_bn(bias, gamma, beta, mean, var, eps=1e-5):
    """Fold (bias -> BatchNorm, inference) into per-channel scale & shift."""
    scale = gamma / jnp.sqrt(var + eps)
    shift = (bias - mean) * scale + beta
    return scale, shift


def _prepare_params(params, in_dim, d2_pad):
    """BN scale folded into bf16 weights; conv weights pre-transposed (C_out, C_in);
    f32 shifts; identity+fc3-bias fused; fc3 padded to a lane-dense width."""
    prep = {}
    # conv1..conv3: transposed weights, shifts as (C_out, 1) columns (lane-broadcast).
    for i in (1, 2, 3):
        scale, shift = _fold_bn(params[f"b{i}"], *params[f"bn{i}"])
        prep[f"w{i}"] = (params[f"w{i}"] * scale[None, :]).T.astype(jnp.bfloat16)
        prep[f"t{i}"] = shift[:, None].astype(jnp.float32)
    # fc1, fc2: standard (C_in, C_out) layout, shifts as (1, C_out) rows.
    for i in (4, 5):
        scale, shift = _fold_bn(params[f"b{i}"], *params[f"bn{i}"])
        prep[f"w{i}"] = (params[f"w{i}"] * scale[None, :]).astype(jnp.bfloat16)
        prep[f"t{i}"] = shift[None, :].astype(jnp.float32)
    d2 = in_dim * in_dim
    eye_flat = jnp.eye(in_dim, dtype=jnp.float32).reshape(-1)
    b6 = params["b6"] + eye_flat
    prep["w6"] = jnp.pad(params["w6"], ((0, 0), (0, d2_pad - d2))).astype(jnp.bfloat16)
    prep["b6"] = jnp.pad(b6, (0, d2_pad - d2))[None, :].astype(jnp.float32)
    return prep


# ----------------------------------------------------------------------------
# Kernel 1: per-point MLP (conv1..conv3) + running max over points.
# Grid: (B, N_pad // TN).  Batch axis parallel, points axis is the reduction.
# Channels on sublanes, points on lanes (lane-dense TN-wide vregs).
# ----------------------------------------------------------------------------
def tnet_pointmlp_kernel(x_ref,                 # (1, Cin, TN) f32
                         w1_ref, t1_ref,        # (C1, Cin) bf16, (C1, 1) f32
                         w2_ref, t2_ref,        # (C2, C1) bf16, (C2, 1) f32
                         w3_ref, t3_ref,        # (C3, C2) bf16, (C3, 1) f32
                         pooled_ref,            # (1, C3, 1) f32
                         maxacc_ref,            # VMEM (C3, TN) f32
                         *, tile_n, n_valid, needs_mask):
    n = pl.program_id(1)

    @pl.when(n == 0)
    def _():
        # ReLU outputs are >= 0, so zero-init is an exact identity for the max.
        maxacc_ref[...] = jnp.zeros(maxacc_ref.shape, maxacc_ref.dtype)

    x = x_ref[0].astype(jnp.bfloat16)                                  # (Cin, TN)

    h = jnp.dot(w1_ref[...], x, preferred_element_type=jnp.float32)
    h = jnp.maximum(h + t1_ref[...], 0.0)                              # (C1, TN)
    h = jnp.dot(w2_ref[...], h.astype(jnp.bfloat16),
                preferred_element_type=jnp.float32)
    h = jnp.maximum(h + t2_ref[...], 0.0)                              # (C2, TN)
    h = jnp.dot(w3_ref[...], h.astype(jnp.bfloat16),
                preferred_element_type=jnp.float32)
    h = jnp.maximum(h + t3_ref[...], 0.0)                              # (C3, TN)

    if needs_mask:
        # Zero out padded point columns (safe: ReLU features are >= 0).
        lane = jax.lax.broadcasted_iota(jnp.int32, h.shape, 1)
        h = jnp.where(n * tile_n + lane < n_valid, h, 0.0)

    # Elementwise (VPU) max fold — no per-tile cross-lane reduction.
    maxacc_ref[...] = jnp.maximum(maxacc_ref[...], h)

    # Single cross-lane (XLU) reduction, once per batch element.
    @pl.when(n == pl.num_programs(1) - 1)
    def _():
        pooled_ref[0] = jnp.max(maxacc_ref[...], axis=1, keepdims=True)   # (C3, 1)


# ----------------------------------------------------------------------------
# Kernel 2: fc1/fc2/fc3 (+ fused identity offset), batched across all B rows.
# ----------------------------------------------------------------------------
def tnet_fc_kernel(f_ref,                  # (B, C3) f32  pooled features
                   w4_ref, t4_ref,         # (C3, C4) bf16, (1, C4) f32
                   w5_ref, t5_ref,         # (C4, C5) bf16, (1, C5) f32
                   w6_ref, b6_ref,         # (C5, D2P) bf16, (1, D2P) f32 (eye + bias)
                   out_ref):               # (B, D2P) f32
    g = jnp.dot(f_ref[...].astype(jnp.bfloat16), w4_ref[...],
                preferred_element_type=jnp.float32)
    g = jnp.maximum(g + t4_ref[...], 0.0)
    g = jnp.dot(g.astype(jnp.bfloat16), w5_ref[...],
                preferred_element_type=jnp.float32)
    g = jnp.maximum(g + t5_ref[...], 0.0)
    out_ref[...] = (jnp.dot(g.astype(jnp.bfloat16), w6_ref[...],
                            preferred_element_type=jnp.float32) + b6_ref[...])


def tnet_forward(x, params, in_dim, feature_dims):
    """x: (B, in_dim, N) float32 — same layout as the PyTorch module."""
    B, Cin, N = x.shape
    assert Cin == in_dim
    C1, C2, C3, C4, C5 = feature_dims
    D2 = in_dim * in_dim
    D2P = _round_up(D2, 128)

    # f32 rows/point in VMEM: input + h1 + h2 + h3 + max accumulator.
    rows_per_point = Cin + C1 + C2 + 2 * C3
    TN = _choose_point_tile(N, rows_per_point)
    N_pad = _round_up(N, TN)
    needs_mask = N_pad != N
    if needs_mask:
        x = jnp.pad(x, ((0, 0), (0, 0), (0, N_pad - N)))
    NT = N_pad // TN

    p = _prepare_params(params, in_dim, D2P)

    def const_spec(arr):
        nd = arr.ndim
        return pl.BlockSpec(arr.shape, lambda *idx, _nd=nd: (0,) * _nd)

    # ---- kernel 1: per-point MLP + max pool -> pooled (B, C3, 1) ----
    pooled = pl.pallas_call(
        functools.partial(tnet_pointmlp_kernel,
                          tile_n=TN, n_valid=N, needs_mask=needs_mask),
        out_shape=jax.ShapeDtypeStruct((B, C3, 1), jnp.float32),
        grid=(B, NT),
        in_specs=[
            pl.BlockSpec((1, Cin, TN), lambda b, n: (b, 0, n)),
            const_spec(p["w1"]), const_spec(p["t1"]),
            const_spec(p["w2"]), const_spec(p["t2"]),
            const_spec(p["w3"]), const_spec(p["t3"]),
        ],
        out_specs=pl.BlockSpec((1, C3, 1), lambda b, n: (b, 0, 0)),
        scratch_shapes=[pltpu.VMEM((C3, TN), jnp.float32)],
        compiler_params=pltpu.CompilerParams(
            dimension_semantics=("parallel", "arbitrary"),
            vmem_limit_bytes=_VMEM_LIMIT_BYTES),
    )(x, p["w1"], p["t1"], p["w2"], p["t2"], p["w3"], p["t3"])

    pooled = pooled.reshape(B, C3)   # free squeeze of the trailing size-1 dim

    # ---- kernel 2: FC stack batched over all B rows ----
    out = pl.pallas_call(
        tnet_fc_kernel,
        out_shape=jax.ShapeDtypeStruct((B, D2P), jnp.float32),
        grid=(1,),
        in_specs=[
            const_spec(pooled),
            const_spec(p["w4"]), const_spec(p["t4"]),
            const_spec(p["w5"]), const_spec(p["t5"]),
            const_spec(p["w6"]), const_spec(p["b6"]),
        ],
        out_specs=pl.BlockSpec((B, D2P), lambda i: (0, 0)),
        compiler_params=pltpu.CompilerParams(
            dimension_semantics=("arbitrary",)),
    )(pooled, p["w4"], p["t4"], p["w5"], p["t5"], p["w6"], p["b6"])

    return out[:, :D2].reshape(B, in_dim, in_dim)


# ----------------------------------------------------------------------------
# Pure-JAX reference using identical preprocessing (same folded bf16 weights).
# ----------------------------------------------------------------------------
def tnet_reference(x, params, in_dim, feature_dims):
    B, Cin, N = x.shape
    D2 = in_dim * in_dim
    D2P = _round_up(D2, 128)
    p = _prepare_params(params, in_dim, D2P)

    h = x                                                   # (B, Cin, N) f32
    for i in (1, 2, 3):
        y = jnp.einsum("oc,bcn->bon", p[f"w{i}"], h.astype(jnp.bfloat16),
                       preferred_element_type=jnp.float32)
        h = jnp.maximum(y + p[f"t{i}"][None, :, :], 0.0)
    f = jnp.max(h, axis=2)                                   # (B, C3)
    for i in (4, 5):
        y = jnp.dot(f.astype(jnp.bfloat16), p[f"w{i}"],
                    preferred_element_type=jnp.float32)
        f = jnp.maximum(y + p[f"t{i}"], 0.0)
    out = jnp.dot(f.astype(jnp.bfloat16), p["w6"],
                  preferred_element_type=jnp.float32) + p["b6"]
    return out[:, :D2].reshape(B, in_dim, in_dim)


def init_params(key, in_dim, feature_dims):
    C1, C2, C3, C4, C5 = feature_dims
    dims = [(in_dim, C1), (C1, C2), (C2, C3), (C3, C4), (C4, C5),
            (C5, in_dim * in_dim)]
    params = {}
    keys = jax.random.split(key, 2 * len(dims) + 5)
    ki = 0
    for i, (din, dout) in enumerate(dims, start=1):
        params[f"w{i}"] = 0.05 * jax.random.normal(keys[ki], (din, dout),
                                                   jnp.float32); ki += 1
        params[f"b{i}"] = 0.05 * jax.random.normal(keys[ki], (dout,),
                                                   jnp.float32); ki += 1
    # BatchNorm params: (gamma, beta, running_mean, running_var)
    for i, c in enumerate([C1, C2, C3, C4, C5], start=1):
        k = keys[ki]; ki += 1
        g = 1.0 + 0.1 * jax.random.normal(jax.random.fold_in(k, 0), (c,), jnp.float32)
        b = 0.1 * jax.random.normal(jax.random.fold_in(k, 1), (c,), jnp.float32)
        m = 0.1 * jax.random.normal(jax.random.fold_in(k, 2), (c,), jnp.float32)
        v = jnp.abs(1.0 + 0.1 * jax.random.normal(jax.random.fold_in(k, 3), (c,),
                                                  jnp.float32))
        params[f"bn{i}"] = (g, b, m, v)
    return params


if __name__ == "__main__":
    # small shapes consistent with the module structure
    IN_DIM = 8
    FEATURE_DIMS = [16, 32, 64, 32, 16]
    B, N = 4, 32

    key = jax.random.PRNGKey(0)
    kx, kp = jax.random.split(key)
    x = jax.random.normal(kx, (B, IN_DIM, N), jnp.float32)  # (B, point_dim, num_points)
    params = init_params(kp, IN_DIM, FEATURE_DIMS)

    fwd = jax.jit(functools.partial(tnet_forward, in_dim=IN_DIM,
                                    feature_dims=FEATURE_DIMS))
    out = fwd(x, params)
    jax.block_until_ready(out)

    ref = tnet_reference(x, params, IN_DIM, FEATURE_DIMS)
    assert out.shape == (B, IN_DIM, IN_DIM)
    assert jnp.allclose(out, ref, atol=2e-3, rtol=2e-3), \
        float(jnp.max(jnp.abs(out - ref)))

    print("KERNEL_OK")
</pallas_src>

<mosaic_0001>
module attributes {stable_mosaic.version = 11 : i64} {
  func.func @tnet_fc_kernel(%arg0: i32, %arg1: memref<4x64xf32, #tpu.memory_space<vmem>>, %arg2: memref<64x32xbf16, #tpu.memory_space<vmem>>, %arg3: memref<1x32xf32, #tpu.memory_space<vmem>>, %arg4: memref<32x16xbf16, #tpu.memory_space<vmem>>, %arg5: memref<1x16xf32, #tpu.memory_space<vmem>>, %arg6: memref<16x128xbf16, #tpu.memory_space<vmem>>, %arg7: memref<1x128xf32, #tpu.memory_space<vmem>>, %arg8: memref<4x128xf32, #tpu.memory_space<vmem>>) attributes {dimension_semantics = [#tpu.dimension_semantics<arbitrary>], iteration_bounds = array<i64: 1>, scalar_prefetch = 0 : i64, scratch_operands = 0 : i64, tpu.core_type = #tpu.core_type<tc>, window_params = [{pipeline_mode = #tpu.pipeline_mode<synchronous>, transform_indices = @transform_0, window_bounds = array<i64: 4, 64>}, {pipeline_mode = #tpu.pipeline_mode<synchronous>, transform_indices = @transform_1, window_bounds = array<i64: 64, 32>}, {pipeline_mode = #tpu.pipeline_mode<synchronous>, transform_indices = @transform_2, window_bounds = array<i64: 1, 32>}, {pipeline_mode = #tpu.pipeline_mode<synchronous>, transform_indices = @transform_3, window_bounds = array<i64: 32, 16>}, {pipeline_mode = #tpu.pipeline_mode<synchronous>, transform_indices = @transform_4, window_bounds = array<i64: 1, 16>}, {pipeline_mode = #tpu.pipeline_mode<synchronous>, transform_indices = @transform_5, window_bounds = array<i64: 16, 128>}, {pipeline_mode = #tpu.pipeline_mode<synchronous>, transform_indices = @transform_6, window_bounds = array<i64: 1, 128>}, {pipeline_mode = #tpu.pipeline_mode<synchronous>, transform_indices = @transform_7, window_bounds = array<i64: 4, 128>}]} {
    %c0 = arith.constant 0 : index
    %c0_0 = arith.constant 0 : index
    %0 = vector.load %arg1[%c0, %c0_0] : memref<4x64xf32, #tpu.memory_space<vmem>>, vector<4x64xf32>
    %1 = arith.truncf %0 : vector<4x64xf32> to vector<4x64xbf16>
    %c0_1 = arith.constant 0 : index
    %c0_2 = arith.constant 0 : index
    %2 = vector.load %arg2[%c0_1, %c0_2] : memref<64x32xbf16, #tpu.memory_space<vmem>>, vector<64x32xbf16>
    %cst = arith.constant dense<0.000000e+00> : vector<4x32xf32>
    %3 = tpu.matmul %1, %2, %cst {dimension_numbers = #tpu.dot_dimension_numbers<[1], [0], [0], [1], [0, 0, 1, 1], [], []>} : vector<4x64xbf16>, vector<64x32xbf16>, vector<4x32xf32> -> vector<4x32xf32>
    %c0_3 = arith.constant 0 : index
    %c0_4 = arith.constant 0 : index
    %4 = vector.load %arg3[%c0_3, %c0_4] : memref<1x32xf32, #tpu.memory_space<vmem>>, vector<1x32xf32>
    %5 = vector.broadcast %4 : vector<1x32xf32> to vector<4x32xf32>
    %6 = arith.addf %3, %5 : vector<4x32xf32>
    %cst_5 = arith.constant 0.000000e+00 : f32
    %7 = vector.broadcast %cst_5 : f32 to vector<4x32xf32>
    %8 = arith.maximumf %6, %7 : vector<4x32xf32>
    %9 = arith.truncf %8 : vector<4x32xf32> to vector<4x32xbf16>
    %c0_6 = arith.constant 0 : index
    %c0_7 = arith.constant 0 : index
    %10 = vector.load %arg4[%c0_6, %c0_7] : memref<32x16xbf16, #tpu.memory_space<vmem>>, vector<32x16xbf16>
    %cst_8 = arith.constant dense<0.000000e+00> : vector<4x16xf32>
    %11 = tpu.matmul %9, %10, %cst_8 {dimension_numbers = #tpu.dot_dimension_numbers<[1], [0], [0], [1], [0, 0, 1, 1], [], []>} : vector<4x32xbf16>, vector<32x16xbf16>, vector<4x16xf32> -> vector<4x16xf32>
    %c0_9 = arith.constant 0 : index
    %c0_10 = arith.constant 0 : index
    %12 = vector.load %arg5[%c0_9, %c0_10] : memref<1x16xf32, #tpu.memory_space<vmem>>, vector<1x16xf32>
    %13 = vector.broadcast %12 : vector<1x16xf32> to vector<4x16xf32>
    %14 = arith.addf %11, %13 : vector<4x16xf32>
    %cst_11 = arith.constant 0.000000e+00 : f32
    %15 = vector.broadcast %cst_11 : f32 to vector<4x16xf32>
    %16 = arith.maximumf %14, %15 : vector<4x16xf32>
    %17 = arith.truncf %16 : vector<4x16xf32> to vector<4x16xbf16>
    %c0_12 = arith.constant 0 : index
    %c0_13 = arith.constant 0 : index
    %18 = vector.load %arg6[%c0_12, %c0_13] : memref<16x128xbf16, #tpu.memory_space<vmem>>, vector<16x128xbf16>
    %cst_14 = arith.constant dense<0.000000e+00> : vector<4x128xf32>
    %19 = tpu.matmul %17, %18, %cst_14 {dimension_numbers = #tpu.dot_dimension_numbers<[1], [0], [0], [1], [0, 0, 1, 1], [], []>} : vector<4x16xbf16>, vector<16x128xbf16>, vector<4x128xf32> -> vector<4x128xf32>
    %c0_15 = arith.constant 0 : index
    %c0_16 = arith.constant 0 : index
    %20 = vector.load %arg7[%c0_15, %c0_16] : memref<1x128xf32, #tpu.memory_space<vmem>>, vector<1x128xf32>
    %21 = vector.broadcast %20 : vector<1x128xf32> to vector<4x128xf32>
    %22 = arith.addf %19, %21 : vector<4x128xf32>
    %c0_17 = arith.constant 0 : index
    %c0_18 = arith.constant 0 : index
    %23 = vector.load %arg8[%c0_17, %c0_18] : memref<4x128xf32, #tpu.memory_space<vmem>>, vector<4x128xf32>
    tpu.vector_store %arg8[%c0_17, %c0_18], %22 {strides = array<i32>} : memref<4x128xf32, #tpu.memory_space<vmem>>, vector<4x128xf32>,
    return
  }
  func.func @transform_0(%arg0: i32) -> (i32, i32) {
    %c0_i32 = arith.constant 0 : i32
    %c0_i32_0 = arith.constant 0 : i32
    %c0_i32_1 = arith.constant 0 : i32
    return %c0_i32, %c0_i32_0 : i32, i32
  }
  func.func @transform_1(%arg0: i32) -> (i32, i32) {
    %c0_i32 = arith.constant 0 : i32
    %c0_i32_0 = arith.constant 0 : i32
    %c0_i32_1 = arith.constant 0 : i32
    return %c0_i32, %c0_i32_0 : i32, i32
  }
  func.func @transform_2(%arg0: i32) -> (i32, i32) {
    %c0_i32 = arith.constant 0 : i32
    %c0_i32_0 = arith.constant 0 : i32
    %c0_i32_1 = arith.constant 0 : i32
    return %c0_i32, %c0_i32_0 : i32, i32
  }
  func.func @transform_3(%arg0: i32) -> (i32, i32) {
    %c0_i32 = arith.constant 0 : i32
    %c0_i32_0 = arith.constant 0 : i32
    %c0_i32_1 = arith.constant 0 : i32
    return %c0_i32, %c0_i32_0 : i32, i32
  }
  func.func @transform_4(%arg0: i32) -> (i32, i32) {
    %c0_i32 = arith.constant 0 : i32
    %c0_i32_0 = arith.constant 0 : i32
    %c0_i32_1 = arith.constant 0 : i32
    return %c0_i32, %c0_i32_0 : i32, i32
  }
  func.func @transform_5(%arg0: i32) -> (i32, i32) {
    %c0_i32 = arith.constant 0 : i32
    %c0_i32_0 = arith.constant 0 : i32
    %c0_i32_1 = arith.constant 0 : i32
    return %c0_i32, %c0_i32_0 : i32, i32
  }
  func.func @transform_6(%arg0: i32) -> (i32, i32) {
    %c0_i32 = arith.constant 0 : i32
    %c0_i32_0 = arith.constant 0 : i32
    %c0_i32_1 = arith.constant 0 : i32
    return %c0_i32, %c0_i32_0 : i32, i32
  }
  func.func @transform_7(%arg0: i32) -> (i32, i32) {
    %c0_i32 = arith.constant 0 : i32
    %c0_i32_0 = arith.constant 0 : i32
    %c0_i32_1 = arith.constant 0 : i32
    return %c0_i32, %c0_i32_0 : i32, i32
  }
}

module attributes {stable_mosaic.version = 11 : i64} {
  func.func @tnet_pointmlp_kernel(%arg0: i32, %arg1: i32, %arg2: memref<1x8x128xf32, #tpu.memory_space<vmem>>, %arg3: memref<16x8xbf16, #tpu.memory_space<vmem>>, %arg4: memref<16x1xf32, #tpu.memory_space<vmem>>, %arg5: memref<32x16xbf16, #tpu.memory_space<vmem>>, %arg6: memref<32x1xf32, #tpu.memory_space<vmem>>, %arg7: memref<64x32xbf16, #tpu.memory_space<vmem>>, %arg8: memref<64x1xf32, #tpu.memory_space<vmem>>, %arg9: memref<1x64x1xf32, #tpu.memory_space<vmem>>, %arg10: memref<64x128xf32, #tpu.memory_space<vmem>>) attributes {dimension_semantics = [#tpu.dimension_semantics<parallel>, #tpu.dimension_semantics<arbitrary>], iteration_bounds = array<i64: 4, 1>, scalar_prefetch = 0 : i64, scratch_operands = 1 : i64, tpu.core_type = #tpu.core_type<tc>, window_params = [{transform_indices = @transform_0, window_bounds = array<i64: 1, 8, 128>}, {pipeline_mode = #tpu.pipeline_mode<synchronous>, transform_indices = @transform_1, window_bounds = array<i64: 16, 8>}, {pipeline_mode = #tpu.pipeline_mode<synchronous>, transform_indices = @transform_2, window_bounds = array<i64: 16, 1>}, {pipeline_mode = #tpu.pipeline_mode<synchronous>, transform_indices = @transform_3, window_bounds = array<i64: 32, 16>}, {pipeline_mode = #tpu.pipeline_mode<synchronous>, transform_indices = @transform_4, window_bounds = array<i64: 32, 1>}, {pipeline_mode = #tpu.pipeline_mode<synchronous>, transform_indices = @transform_5, window_bounds = array<i64: 64, 32>}, {pipeline_mode = #tpu.pipeline_mode<synchronous>, transform_indices = @transform_6, window_bounds = array<i64: 64, 1>}, {transform_indices = @transform_7, window_bounds = array<i64: 1, 64, 1>}]} {
    %c0_i32 = arith.constant 0 : i32
    %0 = arith.cmpi eq, %arg1, %c0_i32 : i32
    %1 = arith.extui %0 : i1 to i32
    %c0_i32_0 = arith.constant 0 : i32
    %2 = arith.cmpi ne, %1, %c0_i32_0 : i32
    scf.if %2 {
      %cst_27 = arith.constant 0.000000e+00 : f32
      %43 = vector.broadcast %cst_27 : f32 to vector<64x128xf32>
      %c0_28 = arith.constant 0 : index
      %c0_29 = arith.constant 0 : index
      %44 = vector.load %arg10[%c0_28, %c0_29] : memref<64x128xf32, #tpu.memory_space<vmem>>, vector<64x128xf32>
      tpu.vector_store %arg10[%c0_28, %c0_29], %43 {strides = array<i32>} : memref<64x128xf32, #tpu.memory_space<vmem>>, vector<64x128xf32>,
    } else {
    }
    %c0 = arith.constant 0 : index
    %c0_1 = arith.constant 0 : index
    %c0_2 = arith.constant 0 : index
    %3 = vector.load %arg2[%c0, %c0_1, %c0_2] : memref<1x8x128xf32, #tpu.memory_space<vmem>>, vector<1x8x128xf32>
    %4 = vector.shape_cast %3 : vector<1x8x128xf32> to vector<8x128xf32>
    %5 = arith.truncf %4 : vector<8x128xf32> to vector<8x128xbf16>
    %c0_3 = arith.constant 0 : index
    %c0_4 = arith.constant 0 : index
    %6 = vector.load %arg3[%c0_3, %c0_4] : memref<16x8xbf16, #tpu.memory_space<vmem>>, vector<16x8xbf16>
    %cst = arith.constant dense<0.000000e+00> : vector<16x128xf32>
    %7 = tpu.matmul %6, %5, %cst {dimension_numbers = #tpu.dot_dimension_numbers<[1], [0], [0], [1], [0, 0, 1, 1], [], []>} : vector<16x8xbf16>, vector<8x128xbf16>, vector<16x128xf32> -> vector<16x128xf32>
    %c0_5 = arith.constant 0 : index
    %c0_6 = arith.constant 0 : index
    %8 = vector.load %arg4[%c0_5, %c0_6] : memref<16x1xf32, #tpu.memory_space<vmem>>, vector<16x1xf32>
    %9 = vector.broadcast %8 : vector<16x1xf32> to vector<16x128xf32>
    %10 = arith.addf %7, %9 : vector<16x128xf32>
    %cst_7 = arith.constant 0.000000e+00 : f32
    %11 = vector.broadcast %cst_7 : f32 to vector<16x128xf32>
    %12 = arith.maximumf %10, %11 : vector<16x128xf32>
    %c0_8 = arith.constant 0 : index
    %c0_9 = arith.constant 0 : index
    %13 = vector.load %arg5[%c0_8, %c0_9] : memref<32x16xbf16, #tpu.memory_space<vmem>>, vector<32x16xbf16>
    %14 = arith.truncf %12 : vector<16x128xf32> to vector<16x128xbf16>
    %cst_10 = arith.constant dense<0.000000e+00> : vector<32x128xf32>
    %15 = tpu.matmul %13, %14, %cst_10 {dimension_numbers = #tpu.dot_dimension_numbers<[1], [0], [0], [1], [0, 0, 1, 1], [], []>} : vector<32x16xbf16>, vector<16x128xbf16>, vector<32x128xf32> -> vector<32x128xf32>
    %c0_11 = arith.constant 0 : index
    %c0_12 = arith.constant 0 : index
    %16 = vector.load %arg6[%c0_11, %c0_12] : memref<32x1xf32, #tpu.memory_space<vmem>>, vector<32x1xf32>
    %17 = vector.broadcast %16 : vector<32x1xf32> to vector<32x128xf32>
    %18 = arith.addf %15, %17 : vector<32x128xf32>
    %cst_13 = arith.constant 0.000000e+00 : f32
    %19 = vector.broadcast %cst_13 : f32 to vector<32x128xf32>
    %20 = arith.maximumf %18, %19 : vector<32x128xf32>
    %c0_14 = arith.constant 0 : index
    %c0_15 = arith.constant 0 : index
    %21 = vector.load %arg7[%c0_14, %c0_15] : memref<64x32xbf16, #tpu.memory_space<vmem>>, vector<64x32xbf16>
    %22 = arith.truncf %20 : vector<32x128xf32> to vector<32x128xbf16>
    %cst_16 = arith.constant dense<0.000000e+00> : vector<64x128xf32>
    %23 = tpu.matmul %21, %22, %cst_16 {dimension_numbers = #tpu.dot_dimension_numbers<[1], [0], [0], [1], [0, 0, 1, 1], [], []>} : vector<64x32xbf16>, vector<32x128xbf16>, vector<64x128xf32> -> vector<64x128xf32>
    %c0_17 = arith.constant 0 : index
    %c0_18 = arith.constant 0 : index
    %24 = vector.load %arg8[%c0_17, %c0_18] : memref<64x1xf32, #tpu.memory_space<vmem>>, vector<64x1xf32>
    %25 = vector.broadcast %24 : vector<64x1xf32> to vector<64x128xf32>
    %26 = arith.addf %23, %25 : vector<64x128xf32>
    %cst_19 = arith.constant 0.000000e+00 : f32
    %27 = vector.broadcast %cst_19 : f32 to vector<64x128xf32>
    %28 = arith.maximumf %26, %27 : vector<64x128xf32>
    %29 = tpu.iota {dimensions = array<i32: 1>} : vector<64x128xi32>
    %c128_i32 = arith.constant 128 : i32
    %30 = arith.muli %arg1, %c128_i32 : i32
    %31 = vector.broadcast %30 : i32 to vector<64x128xi32>
    %32 = arith.addi %31, %29 : vector<64x128xi32>
    %c32_i32 = arith.constant 32 : i32
    %33 = vector.broadcast %c32_i32 : i32 to vector<64x128xi32>
    %34 = arith.cmpi slt, %32, %33 : vector<64x128xi32>
    %cst_20 = arith.constant 0.000000e+00 : f32
    %35 = vector.broadcast %cst_20 : f32 to vector<64x128xf32>
    %36 = arith.select %34, %28, %35 : vector<64x128xi1>, vector<64x128xf32>
    %c0_21 = arith.constant 0 : index
    %c0_22 = arith.constant 0 : index
    %37 = vector.load %arg10[%c0_21, %c0_22] : memref<64x128xf32, #tpu.memory_space<vmem>>, vector<64x128xf32>
    %38 = arith.maximumf %37, %36 : vector<64x128xf32>
    %c0_23 = arith.constant 0 : index
    %c0_24 = arith.constant 0 : index
    %39 = vector.load %arg10[%c0_23, %c0_24] : memref<64x128xf32, #tpu.memory_space<vmem>>, vector<64x128xf32>
    tpu.vector_store %arg10[%c0_23, %c0_24], %38 {strides = array<i32>} : memref<64x128xf32, #tpu.memory_space<vmem>>, vector<64x128xf32>,
    %c0_i32_25 = arith.constant 0 : i32
    %40 = arith.cmpi eq, %arg1, %c0_i32_25 : i32
    %41 = arith.extui %40 : i1 to i32
    %c0_i32_26 = arith.constant 0 : i32
    %42 = arith.cmpi ne, %41, %c0_i32_26 : i32
    scf.if %42 {
      %c0_27 = arith.constant 0 : index
      %c0_28 = arith.constant 0 : index
      %43 = vector.load %arg10[%c0_27, %c0_28] : memref<64x128xf32, #tpu.memory_space<vmem>>, vector<64x128xf32>
      %cst_29 = arith.constant dense<0xFF800000> : vector<64xf32>
      %44 = vector.multi_reduction <maximumf>, %43, %cst_29 [1] : vector<64x128xf32> to vector<64xf32>
      %45 = vector.shape_cast %44 : vector<64xf32> to vector<64x1xf32>
      %c0_30 = arith.constant 0 : index
      %c0_31 = arith.constant 0 : index
      %c0_32 = arith.constant 0 : index
      %46 = vector.load %arg9[%c0_30, %c0_31, %c0_32] : memref<1x64x1xf32, #tpu.memory_space<vmem>>, vector<1x64x1xf32>
      %47 = vector.shape_cast %46 : vector<1x64x1xf32> to vector<64x1xf32>
      %48 = vector.shape_cast %45 : vector<64x1xf32> to vector<1x64x1xf32>
      tpu.vector_store %arg9[%c0_30, %c0_31, %c0_32], %48 {strides = array<i32>} : memref<1x64x1xf32, #tpu.memory_space<vmem>>, vector<1x64x1xf32>,
    } else {
    }
    return
  }
  func.func @transform_0(%arg0: i32, %arg1: i32) -> (i32, i32, i32) {
    %c0_i32 = arith.constant 0 : i32
    %c0_i32_0 = arith.constant 0 : i32
    return %arg0, %c0_i32, %arg1 : i32, i32, i32
  }
  func.func @transform_1(%arg0: i32, %arg1: i32) -> (i32, i32) {
    %c0_i32 = arith.constant 0 : i32
    %c0_i32_0 = arith.constant 0 : i32
    %c0_i32_1 = arith.constant 0 : i32
    return %c0_i32, %c0_i32_0 : i32, i32
  }
  func.func @transform_2(%arg0: i32, %arg1: i32) -> (i32, i32) {
    %c0_i32 = arith.constant 0 : i32
    %c0_i32_0 = arith.constant 0 : i32
    %c0_i32_1 = arith.constant 0 : i32
    return %c0_i32, %c0_i32_0 : i32, i32
  }
  func.func @transform_3(%arg0: i32, %arg1: i32) -> (i32, i32) {
    %c0_i32 = arith.constant 0 : i32
    %c0_i32_0 = arith.constant 0 : i32
    %c0_i32_1 = arith.constant 0 : i32
    return %c0_i32, %c0_i32_0 : i32, i32
  }
  func.func @transform_4(%arg0: i32, %arg1: i32) -> (i32, i32) {
    %c0_i32 = arith.constant 0 : i32
    %c0_i32_0 = arith.constant 0 : i32
    %c0_i32_1 = arith.constant 0 : i32
    return %c0_i32, %c0_i32_0 : i32, i32
  }
  func.func @transform_5(%arg0: i32, %arg1: i32) -> (i32, i32) {
    %c0_i32 = arith.constant 0 : i32
    %c0_i32_0 = arith.constant 0 : i32
    %c0_i32_1 = arith.constant 0 : i32
    return %c0_i32, %c0_i32_0 : i32, i32
  }
  func.func @transform_6(%arg0: i32, %arg1: i32) -> (i32, i32) {
    %c0_i32 = arith.constant 0 : i32
    %c0_i32_0 = arith.constant 0 : i32
    %c0_i32_1 = arith.constant 0 : i32
    return %c0_i32, %c0_i32_0 : i32, i32
  }
  func.func @transform_7(%arg0: i32, %arg1: i32) -> (i32, i32, i32) {
    %c0_i32 = arith.constant 0 : i32
    %c0_i32_0 = arith.constant 0 : i32
    %c0_i32_1 = arith.constant 0 : i32
    return %arg0, %c0_i32, %c0_i32_0 : i32, i32, i32
  }
}

</mosaic_0001>

<llo_original>
// kernel: tnet_forward.3
$region0: #{tnet_forward.3}
  #allocation0 [shape = 'u32[]', space=smem, size = 0x4, offset = 0x4, fixed_abs, tag = 'smem constant byte address 0x4 - core index']
  #allocation1 [shape = 'u32[72,128]{1,0:T(1,128)}', space=vmem, size = 0x9000, scoped, tag = 'internal scratch']
  %s0 = inlined_call_operand.vmem [shape: f32[4,64], index: 0, kind: input, shape index: {}]
  %s1 = inlined_call_operand.vmem [shape: bf16[64,32], index: 1, kind: input, shape index: {}]
  %s2 = inlined_call_operand.vmem [shape: f32[1,32], index: 2, kind: input, shape index: {}]
  %s3 = inlined_call_operand.vmem [shape: bf16[32,16], index: 3, kind: input, shape index: {}]
  %s4 = inlined_call_operand.vmem [shape: f32[1,16], index: 4, kind: input, shape index: {}]
  %s5 = inlined_call_operand.vmem [shape: bf16[16,128], index: 5, kind: input, shape index: {}]
  %s6 = inlined_call_operand.vmem [shape: f32[1,128], index: 6, kind: input, shape index: {}]
  %s7 = inlined_call_operand.vmem [shape: f32[4,128], index: 7, kind: output, shape index: {}]
  %s8 = sld [smem:[#allocation0]]
  $region38: #{tnet_forward.3} parent=0
    _
  %s10 = ssub.s32 1, %s8
  %s11 = scalar_select 0, %s10, %s8
  // Predicated region
  $region2: #{tnet_forward.3} parent=0 // pred_check
    _
  $region3: #{tnet_forward.3} parent=0 // pred_check_branch
    %13 = sbr.rel (0) target = $region5
  $region4: #{tnet_forward.3} parent=0 // pred_region
    _
  $region5: #{tnet_forward.3} parent=0 // pred_fallthru
    _
  // Predicated region
  $region6: #{tnet_forward.3} parent=0 // pred_check
    _
  $region7: #{tnet_forward.3} parent=0 // pred_check_branch
    %15 = sbr.rel (0) target = $region9
  $region8: #{tnet_forward.3} parent=0 // pred_region
    _
  $region9: #{tnet_forward.3} parent=0 // pred_fallthru
    _
  // Predicated region
  $region10: #{tnet_forward.3} parent=0 // pred_check
    _
  $region11: #{tnet_forward.3} parent=0 // pred_check_branch
    %17 = sbr.rel (0) target = $region13
  $region12: #{tnet_forward.3} parent=0 // pred_region
    _
  $region13: #{tnet_forward.3} parent=0 // pred_fallthru
    _
  // Predicated region
  $region14: #{tnet_forward.3} parent=0 // pred_check
    _
  $region15: #{tnet_forward.3} parent=0 // pred_check_branch
    %19 = sbr.rel (0) target = $region17
  $region16: #{tnet_forward.3} parent=0 // pred_region
    _
  $region17: #{tnet_forward.3} parent=0 // pred_fallthru
    _
  // Predicated region
  $region18: #{tnet_forward.3} parent=0 // pred_check
    _
  $region19: #{tnet_forward.3} parent=0 // pred_check_branch
    %21 = sbr.rel (0) target = $region21
  $region20: #{tnet_forward.3} parent=0 // pred_region
    _
  $region21: #{tnet_forward.3} parent=0 // pred_fallthru
    _
  // Predicated region
  $region22: #{tnet_forward.3} parent=0 // pred_check
    _
  $region23: #{tnet_forward.3} parent=0 // pred_check_branch
    %23 = sbr.rel (0) target = $region25
  $region24: #{tnet_forward.3} parent=0 // pred_region
    _
  $region25: #{tnet_forward.3} parent=0 // pred_fallthru
    _
  // Predicated region
  $region26: #{tnet_forward.3} parent=0 // pred_check
    _
  $region27: #{tnet_forward.3} parent=0 // pred_check_branch
    %25 = sbr.rel (0) target = $region29
  $region28: #{tnet_forward.3} parent=0 // pred_region
    _
  $region29: #{tnet_forward.3} parent=0 // pred_fallthru
    _
  %v27 = vld [vmem:[%s0] sm:$0xf]
  %v28 = vpack.c.bf16 %v27, %v27
  %v29 = vld [vmem:[%s1] sm:$0xf]
  %v30 = vld [vmem:[%s1 + $0x4] sm:$0xf]
  %v31 = vld [vmem:[%s1 + $0x8] sm:$0xf]
  %v32 = vld [vmem:[%s1 + $0xc] sm:$0xf]
  %v33 = vld [vmem:[%s1 + $0x10] sm:$0xf]
  %v34 = vld [vmem:[%s1 + $0x14] sm:$0xf]
  %v35 = vld [vmem:[%s1 + $0x18] sm:$0xf]
  %v36 = vld [vmem:[%s1 + $0x1c] sm:$0xf]
  %v37 = vld [vmem:[%s2] sm:$0x1]
  %v39 = vperm.slane %v37, 0
  %v49 = vunpack.c.l.b16 %v29
  %v50 = vunpack.c.l.b16 %v30
  %v51 = vunpack.c.l.b16 %v31
  %v52 = vunpack.c.l.b16 %v32
  %v53 = vunpack.c.l.b16 %v33
  %v54 = vunpack.c.l.b16 %v34
  %v55 = vunpack.c.l.b16 %v35
  %v56 = vunpack.c.l.b16 %v36
  %v57 = vpack.c.b16 %v50, %v49
  %v58 = vpack.c.b16 %v52, %v51
  %v59 = vpack.c.b16 %v54, %v53
  %v60 = vpack.c.b16 %v56, %v55
  %vm65 = vcmask 523264
  %v67 = vsel %vm65, %v28, 0
  %69 = vmatpush.bf16.msra.mxu0 0
  %70 = vmatpush.bf16.msra.mxu0 0
  %71 = vmatpush.bf16.msra.mxu0 0
  %72 = vmatpush.bf16.msra.mxu0 0
  %73 = vmatpush.bf16.msra.mxu0 %v60
  %74 = vmatpush.bf16.msra.mxu0 %v59
  %75 = vmatpush.bf16.msra.mxu0 %v58
  %76 = vmatpush.bf16.msra.mxu0 %v57
  %77 = vmatmul.bf16.gmra.mxu0 %v67
  %v78 = vpop.f32.mrf.mxu0
  %v79 = vadd.f32 %v39, %v78
  %v80 = vpop.f32.mrf.mxu0
  %81 = vdwg.mxu0
  %v82 = vmax.f32 %v79, 0.0
  %v83 = vpack.c.bf16 %v82, %v82
  %v84 = vld [vmem:[%s3] sm:$0xf]
  %v85 = vld [vmem:[%s3 + $0x4] sm:$0xf]
  %v86 = vld [vmem:[%s3 + $0x8] sm:$0xf]
  %v87 = vld [vmem:[%s3 + $0xc] sm:$0xf]
  %v88 = vld [vmem:[%s4] sm:$0x1]
  %v90 = vperm.slane %v88, 0
  %v96 = vunpack.c.l.b16 %v84
  %v97 = vunpack.c.l.b16 %v85
  %v98 = vunpack.c.l.b16 %v86
  %v99 = vunpack.c.l.b16 %v87
  %v100 = vpack.c.b16 %v97, %v96
  %v101 = vpack.c.b16 %v99, %v98
  %vm104 = vcmask 261120
  %v106 = vsel %vm104, %v83, 0
  %108 = vmatpush.bf16.msra.mxu0 0
  %109 = vmatpush.bf16.msra.mxu0 0
  %110 = vmatpush.bf16.msra.mxu0 0
  %111 = vmatpush.bf16.msra.mxu0 0
  %112 = vmatpush.bf16.msra.mxu0 0
  %113 = vmatpush.bf16.msra.mxu0 0
  %114 = vmatpush.bf16.msra.mxu0 %v101
  %115 = vmatpush.bf16.msra.mxu0 %v100
  %116 = vmatmul.bf16.gmra.mxu0 %v106
  %v117 = vpop.f32.mrf.mxu0
  %v118 = vadd.f32 %v90, %v117
  %v119 = vpop.f32.mrf.mxu0
  %120 = vdwg.mxu0
  %v121 = vmax.f32 %v118, 0.0
  %v122 = vpack.c.bf16 %v121, %v121
  %v123 = vld [vmem:[%s5] sm:$0xf]
  %v124 = vld [vmem:[%s5 + $0x4] sm:$0xf]
  %v125 = vld [vmem:[%s6] sm:$0x1]
  %v127 = vperm.slane %v125, 0
  %v131 = vunpack.c.l.b16 %v123
  %v132 = vunpack.c.l.b16 %v124
  %v133 = vpack.c.b16 %v132, %v131
  %vm135 = vcmask 130048
  %v137 = vsel %vm135, %v122, 0
  %139 = vmatpush.bf16.msra.mxu0 0
  %140 = vmatpush.bf16.msra.mxu0 0
  %141 = vmatpush.bf16.msra.mxu0 0
  %142 = vmatpush.bf16.msra.mxu0 0
  %143 = vmatpush.bf16.msra.mxu0 0
  %144 = vmatpush.bf16.msra.mxu0 0
  %145 = vmatpush.bf16.msra.mxu0 0
  %146 = vmatpush.bf16.msra.mxu0 %v133
  %147 = vmatmul.bf16.gmra.mxu0 %v137
  %v148 = vpop.f32.mrf.mxu0
  %v149 = vadd.f32 %v127, %v148
  %v150 = vpop.f32.mrf.mxu0
  %151 = vdwg.mxu0
  %152 = vst [vmem:[%s7] sm:$0xf] %v149
  // Predicated region
  $region30: #{tnet_forward.3} parent=0 // pred_check
    _
  $region31: #{tnet_forward.3} parent=0 // pred_check_branch
    %154 = sbr.rel (0) target = $region33
  $region32: #{tnet_forward.3} parent=0 // pred_region
    _
  $region33: #{tnet_forward.3} parent=0 // pred_fallthru
    _
  // Predicated region
  $region34: #{tnet_forward.3} parent=0 // pred_check
    _
  $region35: #{tnet_forward.3} parent=0 // pred_check_branch
    %156 = sbr.rel (0) target = $region37
  $region36: #{tnet_forward.3} parent=0 // pred_region
    _
  $region37: #{tnet_forward.3} parent=0 // pred_fallthru
    _

// kernel: tnet_forward.2
$region0: #{tnet_forward.2}
  #allocation0 [shape = 'u32[]', space=smem, size = 0x4, offset = 0x4, fixed_abs, tag = 'smem constant byte address 0x4 - core index']
  #allocation1 [shape = 'u32[72,128]{1,0:T(1,128)}', space=vmem, size = 0x9000, scoped, tag = 'internal scratch']
  #allocation2 [shape = 'f32[64,128]{1,0:T(8,128)}', space=vmem, size = 0x8000, scoped, tag = 'scratch operand']
  %s0 = inlined_call_operand.vmem [shape: f32[4,8,128], index: 0, kind: input, shape index: {}]
  %s1 = inlined_call_operand.vmem [shape: bf16[16,8], index: 1, kind: input, shape index: {}]
  %s2 = inlined_call_operand.vmem [shape: f32[16,1], index: 2, kind: input, shape index: {}]
  %s3 = inlined_call_operand.vmem [shape: bf16[32,16], index: 3, kind: input, shape index: {}]
  %s4 = inlined_call_operand.vmem [shape: f32[32,1], index: 4, kind: input, shape index: {}]
  %s5 = inlined_call_operand.vmem [shape: bf16[64,32], index: 5, kind: input, shape index: {}]
  %s6 = inlined_call_operand.vmem [shape: f32[64,1], index: 6, kind: input, shape index: {}]
  %s7 = inlined_call_operand.vmem [shape: f32[4,64,1], index: 7, kind: output, shape index: {}]
  %s8 = sld [smem:[#allocation0]]
  $region69: #{tnet_forward.2} parent=0
    _
  %s10 = ssub.s32 1, %s8
  %s11 = scalar_select 0, %s10, %s8
  loop: start=0, step=1, limit=6
  $region2: #{tnet_forward.2} parent=0 // loop_pre_header
    _
  $region3: #{tnet_forward.2} parent=0 // loop_header
    %s13 = sphi 0, %s17
    %p14 = scmp.ge.s32.totalorder %s13, 6
    %s20 = sphi 0, %s32
    %s21 = sphi 0, %s28
    %s22 = sphi 0, %s20
    %s23 = sphi 0, %s21
    %s24 = sphi 0, %s22
    %s25 = sphi 0, %s23
    %s37 = sphi 0, %s39
    %s40 = sphi 0, %s37
    %s41 = sphi 0, %s40
    %s57 = sphi 0, %s41
    %s61 = sphi 0, %s61
    %s63 = sphi 0, %s61
    %s64 = sphi 0, %s63
    %s78 = sphi 0, %s64
    %s82 = sphi 0, %s82
    %s84 = sphi 0, %s82
    %s85 = sphi 0, %s84
    %s99 = sphi 0, %s85
    %s103 = sphi 0, %s103
    %s105 = sphi 0, %s103
    %s106 = sphi 0, %s105
    %s120 = sphi 0, %s106
    %s124 = sphi 0, %s124
    %s126 = sphi 0, %s124
    %s127 = sphi 0, %s126
    %s141 = sphi 0, %s127
    %s145 = sphi 0, %s145
    %s147 = sphi 0, %s145
    %s148 = sphi 0, %s147
    %s162 = sphi 0, %s148
    %s166 = sphi 0, %s166
    %s168 = sphi 0, %s166
    %s169 = sphi 0, %s168
    %s183 = sphi 0, %s169
    %s189 = sphi 0, %s191
    %s192 = sphi 0, %s189
    %s193 = sphi 0, %s192
    %s209 = sphi 0, %s193
  $region4: #{tnet_forward.2} parent=0 // loop_header_branch
    %16 = sbr.rel (%p14) target = $region8
  $region5: #{tnet_forward.2} parent=0 // loop_body
    %s18 = ssub.s32 %s13, 1
    %s19 = ssub.s32 %s13, 2
    %s26 = sadd.s32 1, %s21
    %p27 = scmp.ge.s32.totalorder %s26, 1
    %s28 = scalar_select %p27, 0, %s26
    %s29 = sadd.s32 1, %s20
    %s30 = scalar_select %p27, %s29, %s20
    %p31 = scmp.ge.s32.totalorder %s30, 4
    %s32 = scalar_select %p31, 0, %s30
    %s33 = ssub.s32 %s20, %s32
    %s34 = ssub.s32 %s21, %s28
    %s35 = sor.u32 %s33, %s34
    %p36 = scmp.eq.s32.totalorder %s35, 0
    %s38 = sadd.s32 %s37, 1
    %s39 = scalar_select %p36, %s37, %s38
    %p42 = pneg %p36
    %p43 = scmp.eq.s32.totalorder %s13, 3
    %p44 = por %p42, %p43
    %p45 = scmp.ne.s32.totalorder %s37, %s40
    %p46 = scmp.eq.s32.totalorder %s13, 0
    %p47 = por %p45, %p46
    %p48 = scmp.ne.s32.totalorder %s37, %s40
    %p49 = scmp.eq.s32.totalorder %s18, 3
    %p50 = por %p48, %p49
    %p51 = scmp.ne.s32.totalorder %s40, %s41
    %p52 = scmp.eq.s32.totalorder %s18, 0
    %p53 = por %p51, %p52
    %p54 = scmp.ne.s32.totalorder %s40, %s41
    %p55 = scmp.eq.s32.totalorder %s19, 3
    %p56 = por %p54, %p55
    %p58 = scmp.ne.s32.totalorder %s41, %s57
    %p59 = scmp.eq.s32.totalorder %s19, 0
    %p60 = por %p58, %p59
    %s62 = sadd.s32 %s61, 1
    %p65 = scmp.eq.s32.totalorder %s13, 3
    %p66 = scmp.ne.s32.totalorder %s61, %s63
    %p67 = scmp.eq.s32.totalorder %s13, 0
    %p68 = por %p66, %p67
    %p69 = scmp.ne.s32.totalorder %s61, %s63
    %p70 = scmp.eq.s32.totalorder %s18, 3
    %p71 = por %p69, %p70
    %p72 = scmp.ne.s32.totalorder %s63, %s64
    %p73 = scmp.eq.s32.totalorder %s18, 0
    %p74 = por %p72, %p73
    %p75 = scmp.ne.s32.totalorder %s63, %s64
    %p76 = scmp.eq.s32.totalorder %s19, 3
    %p77 = por %p75, %p76
    %p79 = scmp.ne.s32.totalorder %s64, %s78
    %p80 = scmp.eq.s32.totalorder %s19, 0
    %p81 = por %p79, %p80
    %s83 = sadd.s32 %s82, 1
    %p86 = scmp.eq.s32.totalorder %s13, 3
    %p87 = scmp.ne.s32.totalorder %s82, %s84
    %p88 = scmp.eq.s32.totalorder %s13, 0
    %p89 = por %p87, %p88
    %p90 = scmp.ne.s32.totalorder %s82, %s84
    %p91 = scmp.eq.s32.totalorder %s18, 3
    %p92 = por %p90, %p91
    %p93 = scmp.ne.s32.totalorder %s84, %s85
    %p94 = scmp.eq.s32.totalorder %s18, 0
    %p95 = por %p93, %p94
    %p96 = scmp.ne.s32.totalorder %s84, %s85
    %p97 = scmp.eq.s32.totalorder %s19, 3
    %p98 = por %p96, %p97
    %p100 = scmp.ne.s32.totalorder %s85, %s99
    %p101 = scmp.eq.s32.totalorder %s19, 0
    %p102 = por %p100, %p101
    %s104 = sadd.s32 %s103, 1
    %p107 = scmp.eq.s32.totalorder %s13, 3
    %p108 = scmp.ne.s32.totalorder %s103, %s105
    %p109 = scmp.eq.s32.totalorder %s13, 0
    %p110 = por %p108, %p109
    %p111 = scmp.ne.s32.totalorder %s103, %s105
    %p112 = scmp.eq.s32.totalorder %s18, 3
    %p113 = por %p111, %p112
    %p114 = scmp.ne.s32.totalorder %s105, %s106
    %p115 = scmp.eq.s32.totalorder %s18, 0
    %p116 = por %p114, %p115
    %p117 = scmp.ne.s32.totalorder %s105, %s106
    %p118 = scmp.eq.s32.totalorder %s19, 3
    %p119 = por %p117, %p118
    %p121 = scmp.ne.s32.totalorder %s106, %s120
    %p122 = scmp.eq.s32.totalorder %s19, 0
    %p123 = por %p121, %p122
    %s125 = sadd.s32 %s124, 1
    %p128 = scmp.eq.s32.totalorder %s13, 3
    %p129 = scmp.ne.s32.totalorder %s124, %s126
    %p130 = scmp.eq.s32.totalorder %s13, 0
    %p131 = por %p129, %p130
    %p132 = scmp.ne.s32.totalorder %s124, %s126
    %p133 = scmp.eq.s32.totalorder %s18, 3
    %p134 = por %p132, %p133
    %p135 = scmp.ne.s32.totalorder %s126, %s127
    %p136 = scmp.eq.s32.totalorder %s18, 0
    %p137 = por %p135, %p136
    %p138 = scmp.ne.s32.totalorder %s126, %s127
    %p139 = scmp.eq.s32.totalorder %s19, 3
    %p140 = por %p138, %p139
    %p142 = scmp.ne.s32.totalorder %s127, %s141
    %p143 = scmp.eq.s32.totalorder %s19, 0
    %p144 = por %p142, %p143
    %s146 = sadd.s32 %s145, 1
    %p149 = scmp.eq.s32.totalorder %s13, 3
    %p150 = scmp.ne.s32.totalorder %s145, %s147
    %p151 = scmp.eq.s32.totalorder %s13, 0
    %p152 = por %p150, %p151
    %p153 = scmp.ne.s32.totalorder %s145, %s147
    %p154 = scmp.eq.s32.totalorder %s18, 3
    %p155 = por %p153, %p154
    %p156 = scmp.ne.s32.totalorder %s147, %s148
    %p157 = scmp.eq.s32.totalorder %s18, 0
    %p158 = por %p156, %p157
    %p159 = scmp.ne.s32.totalorder %s147, %s148
    %p160 = scmp.eq.s32.totalorder %s19, 3
    %p161 = por %p159, %p160
    %p163 = scmp.ne.s32.totalorder %s148, %s162
    %p164 = scmp.eq.s32.totalorder %s19, 0
    %p165 = por %p163, %p164
    %s167 = sadd.s32 %s166, 1
    %p170 = scmp.eq.s32.totalorder %s13, 3
    %p171 = scmp.ne.s32.totalorder %s166, %s168
    %p172 = scmp.eq.s32.totalorder %s13, 0
    %p173 = por %p171, %p172
    %p174 = scmp.ne.s32.totalorder %s166, %s168
    %p175 = scmp.eq.s32.totalorder %s18, 3
    %p176 = por %p174, %p175
    %p177 = scmp.ne.s32.totalorder %s168, %s169
    %p178 = scmp.eq.s32.totalorder %s18, 0
    %p179 = por %p177, %p178
    %p180 = scmp.ne.s32.totalorder %s168, %s169
    %p181 = scmp.eq.s32.totalorder %s19, 3
    %p182 = por %p180, %p181
    %p184 = scmp.ne.s32.totalorder %s169, %s183
    %p185 = scmp.eq.s32.totalorder %s19, 0
    %p186 = por %p184, %p185
    %s187 = ssub.s32 %s20, %s32
    %p188 = scmp.eq.s32.totalorder %s187, 0
    %s190 = sadd.s32 %s189, 1
    %s191 = scalar_select %p188, %s189, %s190
    %p194 = pneg %p188
    %p195 = scmp.eq.s32.totalorder %s13, 3
    %p196 = por %p194, %p195
    %p197 = scmp.ne.s32.totalorder %s189, %s192
    %p198 = scmp.eq.s32.totalorder %s13, 0
    %p199 = por %p197, %p198
    %p200 = scmp.ne.s32.totalorder %s189, %s192
    %p201 = scmp.eq.s32.totalorder %s18, 3
    %p202 = por %p200, %p201
    %p203 = scmp.ne.s32.totalorder %s192, %s193
    %p204 = scmp.eq.s32.totalorder %s18, 0
    %p205 = por %p203, %p204
    %p206 = scmp.ne.s32.totalorder %s192, %s193
    %p207 = scmp.eq.s32.totalorder %s19, 3
    %p208 = por %p206, %p207
    %p210 = scmp.ne.s32.totalorder %s193, %s209
    %p211 = scmp.eq.s32.totalorder %s19, 0
    %p212 = por %p210, %p211
    %p213 = scmp.le.s32.totalorder 1, %s13
    %p214 = scmp.lt.s32.totalorder %s13, 5
    %p215 = pnand %p213, %p214
    %p216 = pneg %p215
    // Predicated region
    $region9: #{tnet_forward.2} parent=5 // pred_check
      _
    $region10: #{tnet_forward.2} parent=5 // pred_check_branch
      %218 = sbr.rel (%p215) target = $region12
    $region11: #{tnet_forward.2} parent=5 // pred_region
      %s219 = ssub.s32 %s13, 1
      // Predicated region
      $region13: #{tnet_forward.2} parent=11 // pred_check
        %p220 = pneg %p74
      $region14: #{tnet_forward.2} parent=11 // pred_check_branch
        %222 = sbr.rel (%p220) target = $region16
      $region15: #{tnet_forward.2} parent=11 // pred_region
        _
      $region16: #{tnet_forward.2} parent=11 // pred_fallthru
        _
      // Predicated region
      $region17: #{tnet_forward.2} parent=11 // pred_check
        %p223 = pneg %p95
      $region18: #{tnet_forward.2} parent=11 // pred_check_branch
        %225 = sbr.rel (%p223) target = $region20
      $region19: #{tnet_forward.2} parent=11 // pred_region
        _
      $region20: #{tnet_forward.2} parent=11 // pred_fallthru
        _
      // Predicated region
      $region21: #{tnet_forward.2} parent=11 // pred_check
        %p226 = pneg %p116
      $region22: #{tnet_forward.2} parent=11 // pred_check_branch
        %228 = sbr.rel (%p226) target = $region24
      $region23: #{tnet_forward.2} parent=11 // pred_region
        _
      $region24: #{tnet_forward.2} parent=11 // pred_fallthru
        _
      // Predicated region
      $region25: #{tnet_forward.2} parent=11 // pred_check
        %p229 = pneg %p137
      $region26: #{tnet_forward.2} parent=11 // pred_check_branch
        %231 = sbr.rel (%p229) target = $region28
      $region27: #{tnet_forward.2} parent=11 // pred_region
        _
      $region28: #{tnet_forward.2} parent=11 // pred_fallthru
        _
      // Predicated region
      $region29: #{tnet_forward.2} parent=11 // pred_check
        %p232 = pneg %p158
      $region30: #{tnet_forward.2} parent=11 // pred_check_branch
        %234 = sbr.rel (%p232) target = $region32
      $region31: #{tnet_forward.2} parent=11 // pred_region
        _
      $region32: #{tnet_forward.2} parent=11 // pred_fallthru
        _
      // Predicated region
      $region33: #{tnet_forward.2} parent=11 // pred_check
        %p235 = pneg %p179
      $region34: #{tnet_forward.2} parent=11 // pred_check_branch
        %237 = sbr.rel (%p235) target = $region36
      $region35: #{tnet_forward.2} parent=11 // pred_region
        _
      $region36: #{tnet_forward.2} parent=11 // pred_fallthru
        _
    $region12: #{tnet_forward.2} parent=5 // pred_fallthru
      _
    %p238 = scmp.lt.s32.totalorder %s13, 4
    // Predicated region
    $region37: #{tnet_forward.2} parent=5 // pred_check
      %p239 = pneg %p238
    $region38: #{tnet_forward.2} parent=5 // pred_check_branch
      %241 = sbr.rel (%p239) target = $region40
    $region39: #{tnet_forward.2} parent=5 // pred_region
      // Predicated region
      $region41: #{tnet_forward.2} parent=39 // pred_check
        %p242 = pneg %p47
      $region42: #{tnet_forward.2} parent=39 // pred_check_branch
        %244 = sbr.rel (%p242) target = $region44
      $region43: #{tnet_forward.2} parent=39 // pred_region
        %p245 = scmp.lt.s32.totalorder %s20, 3
        %s246 = scalar_select %p245, %s20, 3
        %p247 = scmp.lt.s32.totalorder %s21, 0
        %s248 = scalar_select %p247, %s21, 0
        %s249 = sadd.s32 %s248, %s246
        %s250 = smul.addr %s249, 8
        %s251 = scalar_lea.vmem %s0, %s250
      $region44: #{tnet_forward.2} parent=39 // pred_fallthru
        _
    $region40: #{tnet_forward.2} parent=5 // pred_fallthru
      _
    %p252 = scmp.le.s32.totalorder 1, %s13
    %p253 = scmp.lt.s32.totalorder %s13, 5
    %p254 = pnand %p252, %p253
    %p255 = pneg %p254
    // Predicated region
    $region45: #{tnet_forward.2} parent=5 // pred_check
      _
    $region46: #{tnet_forward.2} parent=5 // pred_check_branch
      %257 = sbr.rel (%p254) target = $region48
    $region47: #{tnet_forward.2} parent=5 // pred_region
      %s258 = ssub.s32 %s13, 1
      %p259 = scmp.lt.s32.totalorder %s22, 3
      %s260 = scalar_select %p259, %s22, 3
      %p261 = scmp.lt.s32.totalorder %s23, 0
      %s262 = scalar_select %p261, %s23, 0
      %s263 = sadd.s32 %s262, %s260
      %s264 = smul.addr %s263, 8
      %s265 = scalar_lea.vmem %s0, %s264
      %p266 = pneg %p53
      %p267 = pneg %p50
      %p268 = pneg %p74
      %p269 = pneg %p71
      %p270 = pneg %p95
      %p271 = pneg %p92
      %p272 = pneg %p116
      %p273 = pneg %p113
      %p274 = pneg %p137
      %p275 = pneg %p134
      %p276 = pneg %p158
      %p277 = pneg %p155
      %p278 = pneg %p179
      %p279 = pneg %p176
      %p280 = pneg %p205
      %p281 = pneg %p202
      %p282 = scmp.lt.s32.totalorder %s22, 3
      %s283 = scalar_select %p282, %s22, 3
      %s284 = smul.addr %s283, 8
      %s285 = smul.addr %s284, 8
      %s286 = scalar_lea.vmem %s7, %s285
      %p287 = scmp.lt.s32.totalorder %s22, 3
      %s288 = scalar_select %p287, %s22, 3
      %p289 = scmp.lt.s32.totalorder %s23, 0
      %s290 = scalar_select %p289, %s23, 0
      %s291 = sadd.s32 %s290, %s288
      %s292 = smul.addr %s291, 8
      %s293 = scalar_lea.vmem %s0, %s292
      %p294 = scmp.lt.s32.totalorder %s22, 3
      %s295 = scalar_select %p294, %s22, 3
      %s296 = smul.addr %s295, 8
      %s297 = smul.addr %s296, 8
      %s298 = scalar_lea.vmem %s7, %s297
      %p300 = scmp.eq.s32.totalorder %s23, 0
      // Predicated region
      $region49: #{tnet_forward.2} parent=47 // pred_check
        %p301 = pneg %p300
      $region50: #{tnet_forward.2} parent=47 // pred_check_branch
        %303 = sbr.rel (%p301) target = $region52
      $region51: #{tnet_forward.2} parent=47 // pred_region
        %304 = vst [vmem:[#allocation2] sm:$0xff] 0.0
        %305 = vst [vmem:[#allocation2 + $0x8] sm:$0xff] 0.0
        %306 = vst [vmem:[#allocation2 + $0x10] sm:$0xff] 0.0
        %307 = vst [vmem:[#allocation2 + $0x18] sm:$0xff] 0.0
        %308 = vst [vmem:[#allocation2 + $0x20] sm:$0xff] 0.0
        %309 = vst [vmem:[#allocation2 + $0x28] sm:$0xff] 0.0
        %310 = vst [vmem:[#allocation2 + $0x30] sm:$0xff] 0.0
        %311 = vst [vmem:[#allocation2 + $0x38] sm:$0xff] 0.0
      $region52: #{tnet_forward.2} parent=47 // pred_fallthru
        _
      %v312 = vld [vmem:[%s293] sm:$0xff]
      %v313 = vpack.c.bf16 %v312, %v312
      %v314 = vld [vmem:[%s1] sm:$0xf]
      %v315 = vld [vmem:[%s1 + $0x4] sm:$0xf]
      %v316 = vld [vmem:[%s2] sm:$0xff]
      %v317 = vld [vmem:[%s2 + $0x8] sm:$0xff]
      %319 = vset.pattern.permute.xlu0 0
      %320 = vperm.xlu0 %319, %v316
      %v321 = vpop.permute.xlu0 %320
      %324 = vset.pattern.permute.xlu0 0
      %325 = vperm.xlu0 %324, %v317
      %v326 = vpop.permute.xlu0 %325
      %v330 = vunpack.c.l.b16 %v314
      %v331 = vunpack.c.l.b16 %v315
      %v332 = vpack.c.b16 %v331, %v330
      %vm333 = vcmask 64512
      %v335 = vsel %vm333, %v332, 0
      %vm337 = vcmask 1043456
      %v339 = vsel %vm337, %v313, 0
      %341 = vmatpush.bf16.msra.mxu0 0
      %342 = vmatpush.bf16.msra.mxu0 0
      %343 = vmatpush.bf16.msra.mxu0 0
      %344 = vmatpush.bf16.msra.mxu0 0
      %345 = vmatpush.bf16.msra.mxu0 0
      %346 = vmatpush.bf16.msra.mxu0 0
      %347 = vmatpush.bf16.msra.mxu0 0
      %348 = vmatpush.bf16.msra.mxu0 %v339
      %349 = vmatmul.bf16.gmra.mxu0 %v335
      %v350 = vpop.f32.mrf.mxu0
      %v351 = vadd.f32 %v321, %v350
      %v352 = vpop.f32.mrf.mxu0
      %v353 = vadd.f32 %v326, %v352
      %354 = vdwg.mxu0
      %v355 = vmax.f32 %v351, 0.0
      %v356 = vmax.f32 %v353, 0.0
      %v357 = vld [vmem:[%s3] sm:$0xf]
      %v358 = vld [vmem:[%s3 + $0x4] sm:$0xf]
      %v359 = vld [vmem:[%s3 + $0x8] sm:$0xf]
      %v360 = vld [vmem:[%s3 + $0xc] sm:$0xf]
      %v361 = vpack.c.bf16 %v356, %v355
      %v362 = vld [vmem:[%s4] sm:$0xff]
      %v363 = vld [vmem:[%s4 + $0x8] sm:$0xff]
      %v364 = vld [vmem:[%s4 + $0x10] sm:$0xff]
      %v365 = vld [vmem:[%s4 + $0x18] sm:$0xff]
      %367 = vset.pattern.permute.xlu0 0
      %368 = vperm.xlu0 %367, %v362
      %v369 = vpop.permute.xlu0 %368
      %372 = vset.pattern.permute.xlu0 0
      %373 = vperm.xlu0 %372, %v363
      %v374 = vpop.permute.xlu0 %373
      %377 = vset.pattern.permute.xlu0 0
      %378 = vperm.xlu0 %377, %v364
      %v379 = vpop.permute.xlu0 %378
      %382 = vset.pattern.permute.xlu0 0
      %383 = vperm.xlu0 %382, %v365
      %v384 = vpop.permute.xlu0 %383
      %v390 = vunpack.c.l.b16 %v357
      %v391 = vunpack.c.l.b16 %v358
      %v392 = vunpack.c.l.b16 %v359
      %v393 = vunpack.c.l.b16 %v360
      %v394 = vpack.c.b16 %v391, %v390
      %v395 = vpack.c.b16 %v393, %v392
      %vm396 = vcmask 130048
      %v398 = vsel %vm396, %v394, 0
      %v401 = vsel %vm396, %v395, 0
      %403 = vmatpush.bf16.msra.mxu0 0
      %404 = vmatpush.bf16.msra.mxu0 0
      %405 = vmatpush.bf16.msra.mxu0 0
      %406 = vmatpush.bf16.msra.mxu0 0
      %407 = vmatpush.bf16.msra.mxu0 0
      %408 = vmatpush.bf16.msra.mxu0 0
      %409 = vmatpush.bf16.msra.mxu0 0
      %410 = vmatpush.bf16.msra.mxu0 %v361
      %411 = vmatmul.bf16.gmra.mxu0 %v398
      %v412 = vpop.f32.mrf.mxu0
      %v413 = vadd.f32 %v369, %v412
      %v414 = vpop.f32.mrf.mxu0
      %v415 = vadd.f32 %v374, %v414
      %416 = vmatmul.bf16.gmra.mxu0 %v401
      %v417 = vpop.f32.mrf.mxu0
      %v418 = vadd.f32 %v379, %v417
      %v419 = vpop.f32.mrf.mxu0
      %v420 = vadd.f32 %v384, %v419
      %421 = vdwg.mxu0
      %v422 = vmax.f32 %v413, 0.0
      %v423 = vmax.f32 %v415, 0.0
      %v424 = vmax.f32 %v418, 0.0
      %v425 = vmax.f32 %v420, 0.0
      %v426 = vld [vmem:[%s5] sm:$0xf]
      %v427 = vld [vmem:[%s5 + $0x4] sm:$0xf]
      %v428 = vld [vmem:[%s5 + $0x8] sm:$0xf]
      %v429 = vld [vmem:[%s5 + $0xc] sm:$0xf]
      %v430 = vld [vmem:[%s5 + $0x10] sm:$0xf]
      %v431 = vld [vmem:[%s5 + $0x14] sm:$0xf]
      %v432 = vld [vmem:[%s5 + $0x18] sm:$0xf]
      %v433 = vld [vmem:[%s5 + $0x1c] sm:$0xf]
      %v434 = vpack.c.bf16 %v423, %v422
      %v435 = vpack.c.bf16 %v425, %v424
      %v436 = vld [vmem:[%s6] sm:$0xff]
      %v437 = vld [vmem:[%s6 + $0x8] sm:$0xff]
      %v438 = vld [vmem:[%s6 + $0x10] sm:$0xff]
      %v439 = vld [vmem:[%s6 + $0x18] sm:$0xff]
      %v440 = vld [vmem:[%s6 + $0x20] sm:$0xff]
      %v441 = vld [vmem:[%s6 + $0x28] sm:$0xff]
      %v442 = vld [vmem:[%s6 + $0x30] sm:$0xff]
      %v443 = vld [vmem:[%s6 + $0x38] sm:$0xff]
      %445 = vset.pattern.permute.xlu0 0
      %446 = vperm.xlu0 %445, %v436
      %v447 = vpop.permute.xlu0 %446
      %450 = vset.pattern.permute.xlu0 0
      %451 = vperm.xlu0 %450, %v437
      %v452 = vpop.permute.xlu0 %451
      %455 = vset.pattern.permute.xlu0 0
      %456 = vperm.xlu0 %455, %v438
      %v457 = vpop.permute.xlu0 %456
      %460 = vset.pattern.permute.xlu0 0
      %461 = vperm.xlu0 %460, %v439
      %v462 = vpop.permute.xlu0 %461
      %465 = vset.pattern.permute.xlu0 0
      %466 = vperm.xlu0 %465, %v440
      %v467 = vpop.permute.xlu0 %466
      %470 = vset.pattern.permute.xlu0 0
      %471 = vperm.xlu0 %470, %v441
      %v472 = vpop.permute.xlu0 %471
      %475 = vset.pattern.permute.xlu0 0
      %476 = vperm.xlu0 %475, %v442
      %v477 = vpop.permute.xlu0 %476
      %480 = vset.pattern.permute.xlu0 0
      %481 = vperm.xlu0 %480, %v443
      %v482 = vpop.permute.xlu0 %481
      %v492 = vunpack.c.l.b16 %v426
      %v493 = vunpack.c.l.b16 %v427
      %v494 = vunpack.c.l.b16 %v428
      %v495 = vunpack.c.l.b16 %v429
      %v496 = vunpack.c.l.b16 %v430
      %v497 = vunpack.c.l.b16 %v431
      %v498 = vunpack.c.l.b16 %v432
      %v499 = vunpack.c.l.b16 %v433
      %v500 = vpack.c.b16 %v493, %v492
      %v501 = vpack.c.b16 %v495, %v494
      %v502 = vpack.c.b16 %v497, %v496
      %v503 = vpack.c.b16 %v499, %v498
      %vm504 = vcmask 261120
      %v506 = vsel %vm504, %v500, 0
      %v509 = vsel %vm504, %v501, 0
      %v512 = vsel %vm504, %v502, 0
      %v515 = vsel %vm504, %v503, 0
      %517 = vmatpush.bf16.msra.mxu0 0
      %518 = vmatpush.bf16.msra.mxu0 0
      %519 = vmatpush.bf16.msra.mxu0 0
      %520 = vmatpush.bf16.msra.mxu0 0
      %521 = vmatpush.bf16.msra.mxu0 0
      %522 = vmatpush.bf16.msra.mxu0 0
      %523 = vmatpush.bf16.msra.mxu0 %v435
      %524 = vmatpush.bf16.msra.mxu0 %v434
      %525 = vmatmul.bf16.gmra.mxu0 %v506
      %v526 = vpop.f32.mrf.mxu0
      %v527 = vadd.f32 %v447, %v526
      %v528 = vpop.f32.mrf.mxu0
      %v529 = vadd.f32 %v452, %v528
      %530 = vmatmul.bf16.gmra.mxu0 %v509
      %v531 = vpop.f32.mrf.mxu0
      %v532 = vadd.f32 %v457, %v531
      %v533 = vpop.f32.mrf.mxu0
      %v534 = vadd.f32 %v462, %v533
      %535 = vmatmul.bf16.gmra.mxu0 %v512
      %v536 = vpop.f32.mrf.mxu0
      %v537 = vadd.f32 %v467, %v536
      %v538 = vpop.f32.mrf.mxu0
      %v539 = vadd.f32 %v472, %v538
      %540 = vmatmul.bf16.gmra.mxu0 %v515
      %v541 = vpop.f32.mrf.mxu0
      %v542 = vadd.f32 %v477, %v541
      %v543 = vpop.f32.mrf.mxu0
      %v544 = vadd.f32 %v482, %v543
      %545 = vdwg.mxu0
      %v546 = vmax.f32 %v527, 0.0
      %v547 = vmax.f32 %v529, 0.0
      %v548 = vmax.f32 %v532, 0.0
      %v549 = vmax.f32 %v534, 0.0
      %v550 = vmax.f32 %v537, 0.0
      %v551 = vmax.f32 %v539, 0.0
      %v552 = vmax.f32 %v542, 0.0
      %v553 = vmax.f32 %v544, 0.0
      %v554 = vlaneseq
      %v555 = vand.u32 %v554, 127
      %s556 = smul.u32 %s23, 128
      %v557 = vstv %s556
      %v558 = vadd.s32 %v557, %v555
      %vm559 = vcmp.lt.s32.totalorder %v558, 32
      %v560 = vsel %vm559, %v546, 0.0
      %v561 = vsel %vm559, %v547, 0.0
      %v562 = vsel %vm559, %v548, 0.0
      %v563 = vsel %vm559, %v549, 0.0
      %v564 = vsel %vm559, %v550, 0.0
      %v565 = vsel %vm559, %v551, 0.0
      %v566 = vsel %vm559, %v552, 0.0
      %v567 = vsel %vm559, %v553, 0.0
      %v568 = vld [vmem:[#allocation2] sm:$0xff]
      %v569 = vld [vmem:[#allocation2 + $0x8] sm:$0xff]
      %v570 = vld [vmem:[#allocation2 + $0x10] sm:$0xff]
      %v571 = vld [vmem:[#allocation2 + $0x18] sm:$0xff]
      %v572 = vld [vmem:[#allocation2 + $0x20] sm:$0xff]
      %v573 = vld [vmem:[#allocation2 + $0x28] sm:$0xff]
      %v574 = vld [vmem:[#allocation2 + $0x30] sm:$0xff]
      %v575 = vld [vmem:[#allocation2 + $0x38] sm:$0xff]
      %v576 = vmax.f32 %v568, %v560
      %v577 = vmax.f32 %v569, %v561
      %v578 = vmax.f32 %v570, %v562
      %v579 = vmax.f32 %v571, %v563
      %v580 = vmax.f32 %v572, %v564
      %v581 = vmax.f32 %v573, %v565
      %v582 = vmax.f32 %v574, %v566
      %v583 = vmax.f32 %v575, %v567
      %584 = vst [vmem:[#allocation2] sm:$0xff] %v576
      %585 = vst [vmem:[#allocation2 + $0x8] sm:$0xff] %v577
      %586 = vst [vmem:[#allocation2 + $0x10] sm:$0xff] %v578
      %587 = vst [vmem:[#allocation2 + $0x18] sm:$0xff] %v579
      %588 = vst [vmem:[#allocation2 + $0x20] sm:$0xff] %v580
      %589 = vst [vmem:[#allocation2 + $0x28] sm:$0xff] %v581
      %590 = vst [vmem:[#allocation2 + $0x30] sm:$0xff] %v582
      %591 = vst [vmem:[#allocation2 + $0x38] sm:$0xff] %v583
      // Predicated region
      $region53: #{tnet_forward.2} parent=47 // pred_check
        %p592 = pneg %p300
      $region54: #{tnet_forward.2} parent=47 // pred_check_branch
        %594 = sbr.rel (%p592) target = $region56
      $region55: #{tnet_forward.2} parent=47 // pred_region
        %v595 = vld [vmem:[#allocation2] sm:$0xff]
        %v596 = vld [vmem:[#allocation2 + $0x8] sm:$0xff]
        %v597 = vld [vmem:[#allocation2 + $0x10] sm:$0xff]
        %v598 = vld [vmem:[#allocation2 + $0x18] sm:$0xff]
        %v599 = vld [vmem:[#allocation2 + $0x20] sm:$0xff]
        %v600 = vld [vmem:[#allocation2 + $0x28] sm:$0xff]
        %v601 = vld [vmem:[#allocation2 + $0x30] sm:$0xff]
        %v602 = vld [vmem:[#allocation2 + $0x38] sm:$0xff]
        %603 = vmax.xlane.f32.xlu0 %v595
        %v604 = vpop.xlane.xlu0 %603
        %605 = vmax.xlane.f32.xlu0 %v596
        %v606 = vpop.xlane.xlu0 %605
        %607 = vmax.xlane.f32.xlu0 %v597
        %v608 = vpop.xlane.xlu0 %607
        %609 = vmax.xlane.f32.xlu0 %v598
        %v610 = vpop.xlane.xlu0 %609
        %611 = vmax.xlane.f32.xlu0 %v599
        %v612 = vpop.xlane.xlu0 %611
        %613 = vmax.xlane.f32.xlu0 %v600
        %v614 = vpop.xlane.xlu0 %613
        %615 = vmax.xlane.f32.xlu0 %v601
        %v616 = vpop.xlane.xlu0 %615
        %617 = vmax.xlane.f32.xlu0 %v602
        %v618 = vpop.xlane.xlu0 %617
        %vm619 = vcmask 7168
        %620 = vst.msk [vmem:[%s298] sm:$0xff] %vm619, %v604
        %621 = vst.msk [vmem:[%s298 + $0x8] sm:$0xff] %vm619, %v606
        %622 = vst.msk [vmem:[%s298 + $0x10] sm:$0xff] %vm619, %v608
        %623 = vst.msk [vmem:[%s298 + $0x18] sm:$0xff] %vm619, %v610
        %624 = vst.msk [vmem:[%s298 + $0x20] sm:$0xff] %vm619, %v612
        %625 = vst.msk [vmem:[%s298 + $0x28] sm:$0xff] %vm619, %v614
        %626 = vst.msk [vmem:[%s298 + $0x30] sm:$0xff] %vm619, %v616
        %627 = vst.msk [vmem:[%s298 + $0x38] sm:$0xff] %vm619, %v618
      $region56: #{tnet_forward.2} parent=47 // pred_fallthru
        _
      %p628 = scmp.lt.s32.totalorder %s22, 3
      %s629 = scalar_select %p628, %s22, 3
      %s630 = smul.addr %s629, 8
      %s631 = smul.addr %s630, 8
      %s632 = scalar_lea.vmem %s7, %s631
      // Predicated region
      $region57: #{tnet_forward.2} parent=47 // pred_check
        %p633 = pneg %p202
      $region58: #{tnet_forward.2} parent=47 // pred_check_branch
        %635 = sbr.rel (%p633) target = $region60
      $region59: #{tnet_forward.2} parent=47 // pred_region
        _
      $region60: #{tnet_forward.2} parent=47 // pred_fallthru
        _
    $region48: #{tnet_forward.2} parent=5 // pred_fallthru
      _
    %p636 = scmp.le.s32.totalorder 2, %s13
    // Predicated region
    $region61: #{tnet_forward.2} parent=5 // pred_check
      %p637 = pneg %p636
    $region62: #{tnet_forward.2} parent=5 // pred_check_branch
      %639 = sbr.rel (%p637) target = $region64
    $region63: #{tnet_forward.2} parent=5 // pred_region
      %s640 = ssub.s32 %s13, 2
      // Predicated region
      $region65: #{tnet_forward.2} parent=63 // pred_check
        %p641 = pneg %p208
      $region66: #{tnet_forward.2} parent=63 // pred_check_branch
        %643 = sbr.rel (%p641) target = $region68
      $region67: #{tnet_forward.2} parent=63 // pred_region
        %p644 = scmp.lt.s32.totalorder %s24, 3
        %s645 = scalar_select %p644, %s24, 3
        %s646 = smul.addr %s645, 8
        %s647 = smul.addr %s646, 8
        %s648 = scalar_lea.vmem %s7, %s647
      $region68: #{tnet_forward.2} parent=63 // pred_fallthru
        _
    $region64: #{tnet_forward.2} parent=5 // pred_fallthru
      _
  $region6: #{tnet_forward.2} parent=0 // loop_footer
    %s17 = sadd.s32 1, %s13
  $region7: #{tnet_forward.2} parent=0 // loop_footer_branch
    %12 = sbr.rel target = $region3
  $region8: #{tnet_forward.2} parent=0 // loop_exit
    _

</llo_original>
